<compile_context>
chip_gen: v5e
topology: v5e:2x2
jax: 0.10.0
libtpu: 0.0.40
codegen_flags: <defaults>
</compile_context>

<pallas_src>
import functools

import jax
import jax.numpy as jnp
from jax import lax
from jax.experimental import pallas as pl
from jax.experimental.pallas import tpu as pltpu


def _multihead_kernel(x_ref, wn_ref, o_ref, xn_ref, *, num_head, head_dim,
                      scale, matmul_dtype, approx_recip):
    """One (batch_tile, class_tile) output tile.

    The per-head l2-normalized (and tau/num_head scaled) activations are
    computed once per batch tile (class-tile index 0) and cached in the
    persistent VMEM scratch `xn_ref`; every class tile then does exactly one
    full-K MXU matmul with f32 accumulation.
    """

    @pl.when(pl.program_id(1) == 0)
    def _normalize_x():
        x = x_ref[...].astype(jnp.float32)            # (TB, F)
        tb, f = x.shape
        x2 = x * x

        def _inv(ssq):                                # (TB, 1): scale / ||x_h||
            denom = jnp.sqrt(ssq) + 1e-8
            if approx_recip:
                return pl.reciprocal(denom, approx=True) * scale   # EUP slot
            return scale / denom                      # exact (f32 check path)

        if head_dim % 128 == 0:
            # Lane-aligned static slices: no iota, no masks, no selects.
            parts = []
            for h in range(num_head):                 # num_head small & static
                lo = h * head_dim
                ssq = jnp.sum(x2[:, lo:lo + head_dim], axis=-1, keepdims=True)
                parts.append(x[:, lo:lo + head_dim] * _inv(ssq))
            xn = jnp.concatenate(parts, axis=-1)
        else:
            # Unaligned head_dim: lane-masked segmented reductions (avoids
            # sub-(8,128) relayout slices).
            lane = lax.broadcasted_iota(jnp.int32, (tb, f), 1)
            inv_full = jnp.zeros((tb, f), jnp.float32)
            for h in range(num_head):
                lo, hi = h * head_dim, (h + 1) * head_dim
                mask = (lane >= lo) & (lane < hi)
                ssq = jnp.sum(jnp.where(mask, x2, 0.0), axis=-1, keepdims=True)
                inv_full = jnp.where(mask, _inv(ssq), inv_full)
            xn = x * inv_full

        xn_ref[...] = xn.astype(matmul_dtype)

    # Single full-K matmul contracting the last dims of both operands
    # (== concat-then-matmul; no transpose, no per-head accumulator).
    o_ref[...] = lax.dot_general(
        xn_ref[...], wn_ref[...],
        (((1,), (1,)), ((), ())),
        preferred_element_type=jnp.float32).astype(o_ref.dtype)


def _round_up(n, m):
    return ((n + m - 1) // m) * m


def _tile_and_pad(total, candidates=(512, 256, 128)):
    """MXU/pipeline friendly tile for `total`; pad up when not divisible."""
    for c in candidates:
        if total >= c and total % c == 0:
            return c, total
    if total <= candidates[-1]:
        return total, total            # small dim: one full-extent tile
    tile = 256 if total >= 256 else 128
    return tile, _round_up(total, tile)


def multihead_forward(x, weight, *, num_head=2, tau=16.0, gamma=0.03125,
                      batch_tile=None, class_tile=None,
                      matmul_dtype=jnp.bfloat16):
    """Forward pass of MultiHead. x: (B, feat_dim), weight: (num_classes, feat_dim)."""
    B, F = x.shape
    C, Fw = weight.shape
    assert F == Fw and F % num_head == 0
    head_dim = F // num_head
    scale = tau / num_head
    matmul_dtype = jnp.dtype(matmul_dtype)
    approx_recip = bool(matmul_dtype == jnp.dtype(jnp.bfloat16))

    # ---- Weight causal-norm depends only on the weight: plain JAX, once.
    w3 = weight.astype(jnp.float32).reshape(C, num_head, head_dim)
    w_norm = jnp.sqrt(jnp.sum(w3 * w3, axis=-1, keepdims=True))
    wn = (w3 / (w_norm + gamma)).reshape(C, F).astype(matmul_dtype)

    # ---- Tile selection (256-multiples preferred) + padding instead of
    #      whole-dim fallback for non-divisible B / C.
    if batch_tile is None:
        bt, Bp = _tile_and_pad(B)
    else:
        bt, Bp = batch_tile, _round_up(B, batch_tile)
    if class_tile is None:
        ct, Cp = _tile_and_pad(C)
    else:
        ct, Cp = class_tile, _round_up(C, class_tile)

    x_isz = jnp.dtype(x.dtype).itemsize
    w_isz = matmul_dtype.itemsize

    def _vmem_estimate(bt_, ct_):
        # double-buffered pipeline tiles + xn scratch + in-kernel f32 temps
        return (2 * bt_ * F * x_isz + 2 * ct_ * F * w_isz
                + 2 * bt_ * ct_ * x_isz + bt_ * F * w_isz
                + 4 * bt_ * F * 4)

    # Keep the tile set inside the smallest scoped-VMEM default (v5e: 16 MiB)
    # so double-buffering survives on every generation (v5e/v6e/v7x).
    while _vmem_estimate(bt, ct) > (14 << 20):
        if bt >= ct and bt > 128 and bt % 256 == 0:
            bt //= 2
        elif ct > 128 and ct % 256 == 0:
            ct //= 2
        else:
            break
    Bp, Cp = _round_up(B, bt), _round_up(C, ct)

    xp = x if Bp == B else jnp.pad(x, ((0, Bp - B), (0, 0)))
    wnp = wn if Cp == C else jnp.pad(wn, ((0, Cp - C), (0, 0)))

    grid = (Bp // bt, Cp // ct)
    kernel = functools.partial(_multihead_kernel, num_head=num_head,
                               head_dim=head_dim, scale=scale,
                               matmul_dtype=matmul_dtype,
                               approx_recip=approx_recip)

    out = pl.pallas_call(
        kernel,
        out_shape=jax.ShapeDtypeStruct((Bp, Cp), x.dtype),
        grid_spec=pltpu.PrefetchScalarGridSpec(
            num_scalar_prefetch=0,
            grid=grid,
            in_specs=[
                pl.BlockSpec((bt, F), lambda i, j: (i, 0)),   # x batch tile
                pl.BlockSpec((ct, F), lambda i, j: (j, 0)),   # normalized-w tile
            ],
            out_specs=pl.BlockSpec((bt, ct), lambda i, j: (i, j)),
            # Persistent cache of the normalized batch tile across class tiles.
            scratch_shapes=[pltpu.VMEM((bt, F), matmul_dtype)],
        ),
        compiler_params=pltpu.CompilerParams(
            # Batch axis feeds both v7x TensorCores; class axis must stay
            # sequential because xn is computed at j == 0 and reused.
            dimension_semantics=("parallel", "arbitrary"),
            vmem_limit_bytes=int(min(48 << 20,
                                     max(2 * _vmem_estimate(bt, ct), 16 << 20))),
        ),
        cost_estimate=pl.CostEstimate(
            flops=2 * Bp * Cp * F,
            transcendentals=Bp * num_head,
            bytes_accessed=(Bp * F * x_isz
                            + (Bp // bt) * Cp * F * w_isz
                            + Bp * Cp * x_isz)),
    )(xp, wnp)

    if Bp != B or Cp != C:
        out = out[:B, :C]
    return out


def multihead_reference(x, weight, *, num_head=2, tau=16.0, gamma=0.03125):
    """Plain-JAX reference mirroring the PyTorch forward."""
    F = x.shape[1]
    hd = F // num_head
    scale = tau / num_head
    xs, ws = [], []
    for h in range(num_head):
        xh = x[:, h * hd:(h + 1) * hd]
        wh = weight[:, h * hd:(h + 1) * hd]
        xs.append(xh / (jnp.linalg.norm(xh, axis=1, keepdims=True) + 1e-8))
        ws.append(wh / (jnp.linalg.norm(wh, axis=1, keepdims=True) + gamma))
    nx = jnp.concatenate(xs, axis=1)
    nw = jnp.concatenate(ws, axis=1)
    return (nx * scale) @ nw.T


if __name__ == "__main__":
    key = jax.random.PRNGKey(0)

    def _run_case(B, FEAT, CLASSES, NUM_HEAD, k):
        kx, kw = jax.random.split(k)
        x = jax.random.normal(kx, (B, FEAT), dtype=jnp.float32)
        # nn.init.normal_(weight, 0, 0.01)
        weight = 0.01 * jax.random.normal(kw, (CLASSES, FEAT), dtype=jnp.float32)

        y_ref = multihead_reference(x, weight, num_head=NUM_HEAD)

        # bf16 MXU operands, f32 accumulate -- fast path.
        y = jax.block_until_ready(multihead_forward(x, weight, num_head=NUM_HEAD))
        assert y.shape == (B, CLASSES)
        assert jnp.allclose(y, y_ref, rtol=2e-2, atol=2e-2), "bf16 path mismatch"

        # f32 MXU operands + exact reciprocal -- tighter structural check.
        y32 = jax.block_until_ready(
            multihead_forward(x, weight, num_head=NUM_HEAD,
                              matmul_dtype=jnp.float32))
        assert jnp.allclose(y32, y_ref, rtol=1e-2, atol=1e-2), "f32 path mismatch"

    k1, k2 = jax.random.split(key)
    # Unaligned head_dim (16) -> lane-masked normalization path.
    _run_case(B=8, FEAT=32, CLASSES=16, NUM_HEAD=2, k=k1)
    # 128-aligned head_dim (128) -> lane-aligned-slice normalization path.
    _run_case(B=8, FEAT=256, CLASSES=16, NUM_HEAD=2, k=k2)

    print("KERNEL_OK")
</pallas_src>

<mosaic_0001>
module attributes {stable_mosaic.version = 11 : i64} {
  func.func @_multihead_kernel(%arg0: i32, %arg1: i32, %arg2: memref<8x32xf32, #tpu.memory_space<vmem>>, %arg3: memref<16x32xbf16, #tpu.memory_space<vmem>>, %arg4: memref<8x16xf32, #tpu.memory_space<vmem>>, %arg5: memref<8x32xbf16, #tpu.memory_space<vmem>>) attributes {dimension_semantics = [#tpu.dimension_semantics<parallel>, #tpu.dimension_semantics<arbitrary>], iteration_bounds = array<i64: 1, 1>, scalar_prefetch = 0 : i64, scratch_operands = 1 : i64, tpu.core_type = #tpu.core_type<tc>, window_params = [{transform_indices = @transform_0, window_bounds = array<i64: 8, 32>}, {transform_indices = @transform_1, window_bounds = array<i64: 16, 32>}, {transform_indices = @transform_2, window_bounds = array<i64: 8, 16>}]} {
    %c0_i32 = arith.constant 0 : i32
    %0 = arith.cmpi eq, %arg1, %c0_i32 : i32
    %1 = arith.extui %0 : i1 to i32
    %c0_i32_0 = arith.constant 0 : i32
    %2 = arith.cmpi ne, %1, %c0_i32_0 : i32
    scf.if %2 {
      %c0_6 = arith.constant 0 : index
      %c0_7 = arith.constant 0 : index
      %7 = vector.load %arg2[%c0_6, %c0_7] : memref<8x32xf32, #tpu.memory_space<vmem>>, vector<8x32xf32>
      %8 = arith.mulf %7, %7 : vector<8x32xf32>
      %9 = tpu.iota {dimensions = array<i32: 1>} : vector<8x32xi32>
      %cst_8 = arith.constant 0.000000e+00 : f32
      %10 = vector.broadcast %cst_8 : f32 to vector<8x32xf32>
      %c0_i32_9 = arith.constant 0 : i32
      %11 = vector.broadcast %c0_i32_9 : i32 to vector<8x32xi32>
      %12 = arith.cmpi sge, %9, %11 : vector<8x32xi32>
      %c16_i32 = arith.constant 16 : i32
      %13 = vector.broadcast %c16_i32 : i32 to vector<8x32xi32>
      %14 = arith.cmpi slt, %9, %13 : vector<8x32xi32>
      %15 = arith.andi %12, %14 : vector<8x32xi1>
      %cst_10 = arith.constant 0.000000e+00 : f32
      %16 = vector.broadcast %cst_10 : f32 to vector<8x32xf32>
      %17 = arith.select %15, %8, %16 : vector<8x32xi1>, vector<8x32xf32>
      %cst_11 = arith.constant dense<0.000000e+00> : vector<8xf32>
      %18 = vector.multi_reduction <add>, %17, %cst_11 [1] : vector<8x32xf32> to vector<8xf32>
      %19 = vector.shape_cast %18 : vector<8xf32> to vector<8x1xf32>
      %20 = math.sqrt %19 : vector<8x1xf32>
      %cst_12 = arith.constant 9.99999993E-9 : f32
      %21 = vector.broadcast %cst_12 : f32 to vector<8x1xf32>
      %22 = arith.addf %20, %21 : vector<8x1xf32>
      %23 = tpu.reciprocal %22 {approx = true} : vector<8x1xf32> -> vector<8x1xf32>
      %cst_13 = arith.constant 8.000000e+00 : f32
      %24 = vector.broadcast %cst_13 : f32 to vector<8x1xf32>
      %25 = arith.mulf %23, %24 : vector<8x1xf32>
      %26 = vector.shape_cast %25 : vector<8x1xf32> to vector<8x1xf32>
      %27 = vector.broadcast %26 : vector<8x1xf32> to vector<8x32xf32>
      %28 = arith.select %15, %27, %10 : vector<8x32xi1>, vector<8x32xf32>
      %c16_i32_14 = arith.constant 16 : i32
      %29 = vector.broadcast %c16_i32_14 : i32 to vector<8x32xi32>
      %30 = arith.cmpi sge, %9, %29 : vector<8x32xi32>
      %c32_i32 = arith.constant 32 : i32
      %31 = vector.broadcast %c32_i32 : i32 to vector<8x32xi32>
      %32 = arith.cmpi slt, %9, %31 : vector<8x32xi32>
      %33 = arith.andi %30, %32 : vector<8x32xi1>
      %cst_15 = arith.constant 0.000000e+00 : f32
      %34 = vector.broadcast %cst_15 : f32 to vector<8x32xf32>
      %35 = arith.select %33, %8, %34 : vector<8x32xi1>, vector<8x32xf32>
      %cst_16 = arith.constant dense<0.000000e+00> : vector<8xf32>
      %36 = vector.multi_reduction <add>, %35, %cst_16 [1] : vector<8x32xf32> to vector<8xf32>
      %37 = vector.shape_cast %36 : vector<8xf32> to vector<8x1xf32>
      %38 = math.sqrt %37 : vector<8x1xf32>
      %cst_17 = arith.constant 9.99999993E-9 : f32
      %39 = vector.broadcast %cst_17 : f32 to vector<8x1xf32>
      %40 = arith.addf %38, %39 : vector<8x1xf32>
      %41 = tpu.reciprocal %40 {approx = true} : vector<8x1xf32> -> vector<8x1xf32>
      %cst_18 = arith.constant 8.000000e+00 : f32
      %42 = vector.broadcast %cst_18 : f32 to vector<8x1xf32>
      %43 = arith.mulf %41, %42 : vector<8x1xf32>
      %44 = vector.shape_cast %43 : vector<8x1xf32> to vector<8x1xf32>
      %45 = vector.broadcast %44 : vector<8x1xf32> to vector<8x32xf32>
      %46 = arith.select %33, %45, %28 : vector<8x32xi1>, vector<8x32xf32>
      %47 = arith.mulf %7, %46 : vector<8x32xf32>
      %48 = arith.truncf %47 : vector<8x32xf32> to vector<8x32xbf16>
      %c0_19 = arith.constant 0 : index
      %c0_20 = arith.constant 0 : index
      %49 = vector.load %arg5[%c0_19, %c0_20] : memref<8x32xbf16, #tpu.memory_space<vmem>>, vector<8x32xbf16>
      tpu.vector_store %arg5[%c0_19, %c0_20], %48 {strides = array<i32>} : memref<8x32xbf16, #tpu.memory_space<vmem>>, vector<8x32xbf16>,
    } else {
    }
    %c0 = arith.constant 0 : index
    %c0_1 = arith.constant 0 : index
    %3 = vector.load %arg5[%c0, %c0_1] : memref<8x32xbf16, #tpu.memory_space<vmem>>, vector<8x32xbf16>
    %c0_2 = arith.constant 0 : index
    %c0_3 = arith.constant 0 : index
    %4 = vector.load %arg3[%c0_2, %c0_3] : memref<16x32xbf16, #tpu.memory_space<vmem>>, vector<16x32xbf16>
    %cst = arith.constant dense<0.000000e+00> : vector<8x16xf32>
    %5 = tpu.matmul %3, %4, %cst {dimension_numbers = #tpu.dot_dimension_numbers<[1], [1], [0], [0], [0, 0, 1, 0], [], []>} : vector<8x32xbf16>, vector<16x32xbf16>, vector<8x16xf32> -> vector<8x16xf32>
    %c0_4 = arith.constant 0 : index
    %c0_5 = arith.constant 0 : index
    %6 = vector.load %arg4[%c0_4, %c0_5] : memref<8x16xf32, #tpu.memory_space<vmem>>, vector<8x16xf32>
    tpu.vector_store %arg4[%c0_4, %c0_5], %5 {strides = array<i32>} : memref<8x16xf32, #tpu.memory_space<vmem>>, vector<8x16xf32>,
    return
  }
  func.func @transform_0(%arg0: i32, %arg1: i32) -> (i32, i32) {
    %c0_i32 = arith.constant 0 : i32
    %c0_i32_0 = arith.constant 0 : i32
    return %arg0, %c0_i32 : i32, i32
  }
  func.func @transform_1(%arg0: i32, %arg1: i32) -> (i32, i32) {
    %c0_i32 = arith.constant 0 : i32
    %c0_i32_0 = arith.constant 0 : i32
    return %arg1, %c0_i32 : i32, i32
  }
  func.func @transform_2(%arg0: i32, %arg1: i32) -> (i32, i32) {
    %c0_i32 = arith.constant 0 : i32
    return %arg0, %arg1 : i32, i32
  }
}

</mosaic_0001>

<llo_original>
// kernel: tpu_custom_call.1
$region0: #{tpu_custom_call.1}
  #allocation0 [shape = 'u32[]', space=smem, size = 0x4, offset = 0x4, fixed_abs, tag = 'smem constant byte address 0x4 - core index']
  #allocation1 [shape = 'u32[72,128]{1,0:T(1,128)}', space=vmem, size = 0x9000, scoped, tag = 'internal scratch']
  #allocation2 [shape = 'bf16[8,32]{1,0:T(8,128)(2,1)}', space=vmem, size = 0x800, scoped, tag = 'scratch operand']
  %s0 = inlined_call_operand.hbm [shape: f32[8,32], index: 0, kind: input, shape index: {}]
  %s1 = inlined_call_operand.hbm [shape: bf16[16,32], index: 1, kind: input, shape index: {}]
  %s2 = inlined_call_operand.hbm [shape: f32[8,16], index: 2, kind: output, shape index: {}]
  %s3 = sld [smem:[#allocation0]]
  $region30: #{tpu_custom_call.1} parent=0
    _
  %s5 = ssub.s32 1, %s3
  %s6 = scalar_select 0, %s5, %s3
  $region1: #{tpu_custom_call.1} parent=0
    #allocation3 [shape = 'u8[4096]{0}', space=vmem, size = 0x1000, scoped, tag = 'input window, operand 0, single buffered']
    #allocation4 [shape = 's32[1]{0}', space=sflag, size = 0x4, scoped, tag = 'scoped memory for tpu_custom_call.1']
    #allocation5 [shape = 's32[1]{0}', space=sflag, size = 0x4, scoped, tag = 'scoped memory for tpu_custom_call.1']
    #allocation6 [shape = 'u8[4096]{0}', space=vmem, size = 0x1000, scoped, tag = 'input window, operand 1, single buffered']
    #allocation7 [shape = 's32[1]{0}', space=sflag, size = 0x4, scoped, tag = 'scoped memory for tpu_custom_call.1']
    #allocation8 [shape = 'u8[4096]{0}', space=vmem, size = 0x1000, scoped, tag = 'output window, operand 0, single buffered']
    %7 = vsyncpa [#allocation4], 0
    %8 = vsyncpa [#allocation7], 0
    %9 = vsyncpa [#allocation5], 0
    // Predicated region
    $region2: #{tpu_custom_call.1} parent=1 // pred_check
      _
    $region3: #{tpu_custom_call.1} parent=1 // pred_check_branch
      %11 = sbr.rel (0) target = $region5
    $region4: #{tpu_custom_call.1} parent=1 // pred_region
      %13 = vsyncadd [#allocation4], 0
      %s15 = sshll.u32 %s0, 4
      %s16 = int_to_ptr.hbm [resolvable:$true] %s15
      %s17 = sshll.u32 [#allocation3], 4
      %s18 = int_to_ptr.vmem [resolvable:$true] %s17
      %20 = dma.hbm_to_vmem [thread:$0]  %s16, 128, %s18, [#allocation4]
    $region5: #{tpu_custom_call.1} parent=1 // pred_fallthru
      _
    // Predicated region
    $region6: #{tpu_custom_call.1} parent=1 // pred_check
      _
    $region7: #{tpu_custom_call.1} parent=1 // pred_check_branch
      %22 = sbr.rel (0) target = $region9
    $region8: #{tpu_custom_call.1} parent=1 // pred_region
      %24 = vsyncadd [#allocation7], 0
      %s25 = sshll.u32 %s1, 4
      %s26 = int_to_ptr.hbm [resolvable:$true] %s25
      %s27 = sshll.u32 [#allocation6], 4
      %s28 = int_to_ptr.vmem [resolvable:$true] %s27
      %33 = dma.hbm_to_vmem [thread:$0]  %s26, 128, %s28, [#allocation7], 64, 64, 4
    $region9: #{tpu_custom_call.1} parent=1 // pred_fallthru
      _
    // Predicated region
    $region10: #{tpu_custom_call.1} parent=1 // pred_check
      _
    $region11: #{tpu_custom_call.1} parent=1 // pred_check_branch
      %35 = sbr.rel (0) target = $region13
    $region12: #{tpu_custom_call.1} parent=1 // pred_region
      %37 = dma.done [#allocation4], 128
    $region13: #{tpu_custom_call.1} parent=1 // pred_fallthru
      _
    // Predicated region
    $region14: #{tpu_custom_call.1} parent=1 // pred_check
      _
    $region15: #{tpu_custom_call.1} parent=1 // pred_check_branch
      %39 = sbr.rel (0) target = $region17
    $region16: #{tpu_custom_call.1} parent=1 // pred_region
      %41 = dma.done [#allocation7], 128
    $region17: #{tpu_custom_call.1} parent=1 // pred_fallthru
      _
    %p43 = scmp.eq.s32.totalorder 0, 0
    // Predicated region
    $region18: #{tpu_custom_call.1} parent=1 // pred_check
      %p44 = pneg %p43
    $region19: #{tpu_custom_call.1} parent=1 // pred_check_branch
      %46 = sbr.rel (%p44) target = $region21
    $region20: #{tpu_custom_call.1} parent=1 // pred_region
      %v47 = vld [vmem:[#allocation3] sm:$0xff]
      %v48 = vmul.f32 %v47, %v47
      %v49 = vlaneseq
      %v50 = vand.u32 %v49, 127
      %vm51 = vcmp.ge.s32.totalorder %v50, 0
      %vm52 = vcmp.lt.s32.totalorder %v50, 16
      %vm53 = vmand %vm51, %vm52
      %v54 = vsel %vm53, %v48, 0.0
      %vm55 = vcmask 261120
      %v56 = vsel %vm55, %v54, 0.0
      %57 = vadd.xlane.f32.xlu0 %v56
      %v58 = vpop.xlane.xlu0 %57
      %v59 = vrsqrt.pop %v58
      %v60 = vmul.f32 %v59, %v58
      %v61 = vmul.f32 %v60, %v59
      %v62 = vmul.f32 0.5, %v61
      %v63 = vsub.f32 1.5, %v62
      %v64 = vmul.f32 %v59, %v63
      %v65 = vmul.f32 %v58, %v64
      %vm66 = vcmp.eq.f32.partialorder %v58, inf
      %v67 = vsel %vm66, %v58, %v65
      %vm68 = vcmp.eq.f32.partialorder %v58, 0.0
      %v69 = vand.u32 %v58, 2147483648
      %v70 = vsel %vm68, %v69, %v67
      %v71 = vadd.f32 %v70, 1e-08
      %v72 = vrcp.pop %v71
      %v73 = vmul.f32 %v72, 8.0
      %v74 = vsel %vm53, %v73, 0.0
      %vm75 = vcmp.ge.s32.totalorder %v50, 16
      %vm76 = vcmp.lt.s32.totalorder %v50, 32
      %vm77 = vmand %vm75, %vm76
      %v78 = vsel %vm77, %v48, 0.0
      %v79 = vsel %vm55, %v78, 0.0
      %80 = vadd.xlane.f32.xlu0 %v79
      %v81 = vpop.xlane.xlu0 %80
      %v82 = vrsqrt.pop %v81
      %v83 = vmul.f32 %v82, %v81
      %v84 = vmul.f32 %v83, %v82
      %v85 = vmul.f32 0.5, %v84
      %v86 = vsub.f32 1.5, %v85
      %v87 = vmul.f32 %v82, %v86
      %v88 = vmul.f32 %v81, %v87
      %vm89 = vcmp.eq.f32.partialorder %v81, inf
      %v90 = vsel %vm89, %v81, %v88
      %vm91 = vcmp.eq.f32.partialorder %v81, 0.0
      %v92 = vand.u32 %v81, 2147483648
      %v93 = vsel %vm91, %v92, %v90
      %v94 = vadd.f32 %v93, 1e-08
      %v95 = vrcp.pop %v94
      %v96 = vmul.f32 %v95, 8.0
      %v97 = vsel %vm77, %v96, %v74
      %v98 = vmul.f32 %v47, %v97
      %v99 = vpack.c.bf16 %v98, %v98
      %vm100 = vcmask 257024
      %101 = vst.msk [vmem:[#allocation2] sm:$0xf] %vm100, %v99
    $region21: #{tpu_custom_call.1} parent=1 // pred_fallthru
      _
    %v102 = vld [vmem:[#allocation2] sm:$0xf]
    %v103 = vld [vmem:[#allocation6] sm:$0xf]
    %v104 = vld [vmem:[#allocation6 + $0x4] sm:$0xf]
    %v107 = vunpack.c.l.b16 %v103
    %v108 = vunpack.c.l.b16 %v104
    %v109 = vpack.c.b16 %v108, %v107
    %vm110 = vcmask 261120
    %v112 = vsel %vm110, %v102, 0
    %v115 = vsel %vm110, %v109, 0
    %117 = vmatpush.bf16.xpose.msra.mxu0 0
    %118 = vmatpush.bf16.xpose.msra.mxu0 0
    %119 = vmatpush.bf16.xpose.msra.mxu0 0
    %120 = vmatpush.bf16.xpose.msra.mxu0 0
    %121 = vmatpush.bf16.xpose.msra.mxu0 0
    %122 = vmatpush.bf16.xpose.msra.mxu0 0
    %123 = vmatpush.bf16.xpose.msra.mxu0 0
    %124 = vmatpush.bf16.xpose.msra.mxu0 %v115
    %125 = vmatmul.bf16.gmra.mxu0 %v112
    %v126 = vpop.f32.mrf.mxu0
    %v127 = vadd.f32 0.0, %v126
    %v128 = vpop.f32.mrf.mxu0
    %129 = vdwg.mxu0
    %vm130 = vcmask 130048
    %131 = vst.msk [vmem:[#allocation8] sm:$0xff] %vm130, %v127
    // Predicated region
    $region22: #{tpu_custom_call.1} parent=1 // pred_check
      _
    $region23: #{tpu_custom_call.1} parent=1 // pred_check_branch
      %133 = sbr.rel (0) target = $region25
    $region24: #{tpu_custom_call.1} parent=1 // pred_region
      %135 = vsyncadd [#allocation5], 0
      %s137 = sshll.u32 [#allocation8], 4
      %s138 = int_to_ptr.vmem [resolvable:$true] %s137
      %s139 = sshll.u32 %s2, 4
      %s140 = int_to_ptr.hbm [resolvable:$true] %s139
      %142 = dma.vmem_to_hbm [thread:$0]  %s138, 128, %s140, [#allocation5]
    $region25: #{tpu_custom_call.1} parent=1 // pred_fallthru
      _
    // Predicated region
    $region26: #{tpu_custom_call.1} parent=1 // pred_check
      _
    $region27: #{tpu_custom_call.1} parent=1 // pred_check_branch
      %144 = sbr.rel (0) target = $region29
    $region28: #{tpu_custom_call.1} parent=1 // pred_region
      %146 = dma.done [#allocation5], 128
    $region29: #{tpu_custom_call.1} parent=1 // pred_fallthru
      _
    %147 = vsyncpa [#allocation4], 1
    %148 = vsyncpa [#allocation7], 1
    %149 = vsyncpa [#allocation5], 1

</llo_original>
